<compile_context>
chip_gen: v7x
topology: tpu7x:2x2x1
jax: 0.10.0
libtpu: 0.0.40
codegen_flags: <defaults>
</compile_context>

<pallas_src>
import jax
import jax.numpy as jnp
from jax.experimental import pallas as pl
from jax.experimental.pallas import tpu as pltpu


def _round_up(n: int, m: int) -> int:
    return ((n + m - 1) // m) * m


def _cdiv(n: int, m: int) -> int:
    return (n + m - 1) // m


def _tpu_budgets():
    """Per-generation (bytes-per-step target, VMEM budget) for the x tile."""
    vmem_cap = 128 << 20  # v5e / v6e physical VMEM
    try:
        info = pltpu.get_tpu_info()
        vmem_cap = int(getattr(info, "vmem_capacity_bytes", vmem_cap))
    except Exception:
        pass
    if vmem_cap <= (64 << 20):
        # v7x-class: ~3.2 TB/s HBM per TC needs more bytes/step to amortize the
        # ~0.35 us step overhead, but only 64 MiB physical VMEM -> tighter cap.
        return 8 << 20, 40 << 20
    # v5e / v6e: 2-4 MiB per step already reaches ~85% of the HBM roofline.
    return 4 << 20, 32 << 20


def wide_kernel(x_ref, w_ref, o_ref):
    # x_ref: (tb, D) streamed batch tile, w_ref: (1, D) resident weight row,
    # o_ref: (tb, 1) output block.
    #
    # out[b] = sum_d x[b, d] * w[d]: VPU multiply (sublane broadcast of the
    # weight row) + XLU lane reduction.  Both operands keep their natural
    # layout (no transpose of the large x tile), accumulation is exact f32,
    # and the kernel is HBM-bandwidth bound so VPU/XLU throughput never binds.
    o_ref[...] = jnp.sum(
        x_ref[...] * w_ref[...], axis=1, keepdims=True
    ).astype(o_ref.dtype)


def wide_forward(x, w, *, max_tile_rows=None, bytes_per_step=None, vmem_budget=None):
    """Wide / linear layer: (B, D) @ (D, 1) -> (B, 1) as a Pallas TPU kernel."""
    B, D = x.shape
    assert w.shape == (D, 1)

    auto_bytes, auto_vmem = _tpu_budgets()
    if bytes_per_step is None:
        bytes_per_step = auto_bytes
    if vmem_budget is None:
        vmem_budget = auto_vmem

    # Per-row VMEM cost: x row (double-buffered) + the (tb, 1) output block's
    # padded footprint (a (tb, 1) f32 VMEM buffer tiles to 512 B/row, also
    # double-buffered).
    x_row_bytes = D * 4
    vmem_per_row = 2 * x_row_bytes + 2 * 512

    # Tile rows sized by *bytes*: big enough to amortize the ~0.35 us/step
    # pipeline overhead, small enough for the per-generation VMEM budget.
    tb = min(bytes_per_step // x_row_bytes, vmem_budget // vmem_per_row)
    if max_tile_rows is not None:
        tb = min(tb, max_tile_rows)
    tb = max(tb, 8)

    if tb >= B:
        # Whole batch fits in one step.  If it is big enough, split into two
        # 128-aligned tiles so the "parallel" grid axis can shard across both
        # TensorCores on v7x (neutral on single-TC v5e/v6e).
        half = _round_up(_cdiv(B, 2), 128)
        if B >= 2 * 128 and half < B:
            tb = half
        else:
            tb = B  # single full-extent block: no edge block at all
    else:
        tb = max((tb // 128) * 128, 128)  # 128-aligned streamed tiles
        tb = min(tb, B)                   # degenerate: tiny B with huge D
    # TODO(synk): for extreme feature dims where even a minimal (128, D) x tile
    # exceeds the VMEM budget, add an inner "arbitrary" K grid axis over D with
    # a (tb, 1) f32 accumulator (pl.when init on k==0, store on last k).

    num_tiles = _cdiv(B, tb)
    b_pad = num_tiles * tb

    # Weight as a (1, D) lane-major row: compact in VMEM and, thanks to the
    # constant index_map, DMA'd once and resident across all grid steps.
    w_row = w.reshape(1, D)

    # Explicit scoped-VMEM limit: x double-buffer + output double-buffer +
    # resident w row, plus headroom; capped below v7x's 64 MiB physical VMEM.
    vmem_needed = tb * vmem_per_row + 2 * 8 * _round_up(D, 128) * 4
    vmem_limit = int(min(max(vmem_needed + (4 << 20), 16 << 20), 48 << 20))

    out = pl.pallas_call(
        wide_kernel,
        out_shape=jax.ShapeDtypeStruct((b_pad, 1), jnp.float32),
        grid_spec=pltpu.PrefetchScalarGridSpec(
            num_scalar_prefetch=0,
            grid=(num_tiles,),
            in_specs=[
                # Streamed x tiles (double-buffered by Pallas).  The last block
                # may be ragged (B % tb != 0): rows past B are unspecified but
                # only affect padded output rows, which are sliced off below.
                pl.BlockSpec((tb, D), lambda i: (i, 0)),
                # Resident weight row (same block every step).
                pl.BlockSpec((1, D), lambda i: (0, 0)),
            ],
            # Output is padded to b_pad (only b_pad*4 bytes) so every store is
            # in-bounds; output traffic is 1/D of total, narrow store is fine.
            out_specs=pl.BlockSpec((tb, 1), lambda i: (i, 0)),
        ),
        compiler_params=pltpu.CompilerParams(
            dimension_semantics=("parallel",),
            vmem_limit_bytes=vmem_limit,
        ),
        cost_estimate=pl.CostEstimate(
            flops=2 * B * D,
            transcendentals=0,
            bytes_accessed=4 * (B * D + D + B),
        ),
    )(x, w_row)

    return out[:B] if b_pad != B else out


def init_wide_params(key, input_dim):
    # torch.nn.init.xavier_uniform_ on an (input_dim, 1) parameter:
    # bound = sqrt(6 / (fan_in + fan_out)) = sqrt(6 / (input_dim + 1))
    bound = jnp.sqrt(6.0 / (input_dim + 1))
    return jax.random.uniform(
        key, (input_dim, 1), dtype=jnp.float32, minval=-bound, maxval=bound
    )


if __name__ == "__main__":
    key = jax.random.PRNGKey(0)
    k_x, k_w = jax.random.split(key)

    batch = 200
    input_dim = 64

    x = jax.random.normal(k_x, (batch, input_dim), dtype=jnp.float32)
    w = init_wide_params(k_w, input_dim)
    ref = x @ w

    # Default path: byte-sized tile (single full-extent block at this size).
    out = jax.block_until_ready(wide_forward(x, w))
    assert out.shape == (batch, 1)
    assert jnp.allclose(out, ref, atol=1e-4, rtol=1e-4)

    # Forced small tiles: exercises the multi-step pipeline and the ragged
    # last x block (200 = 128 + 72) that replaced the wrapper-side jnp.pad.
    out_tiled = jax.block_until_ready(wide_forward(x, w, max_tile_rows=128))
    assert out_tiled.shape == (batch, 1)
    assert jnp.allclose(out_tiled, ref, atol=1e-4, rtol=1e-4)

    print("KERNEL_OK")
</pallas_src>

<mosaic_0001>
module attributes {stable_mosaic.version = 11 : i64} {
  func.func @wide_kernel(%arg0: i32, %arg1: memref<200x64xf32, #tpu.memory_space<vmem>>, %arg2: memref<1x64xf32, #tpu.memory_space<vmem>>, %arg3: memref<200x1xf32, #tpu.memory_space<vmem>>) attributes {dimension_semantics = [#tpu.dimension_semantics<parallel>], iteration_bounds = array<i64: 1>, scalar_prefetch = 0 : i64, scratch_operands = 0 : i64, tpu.core_type = #tpu.core_type<tc>, window_params = [{transform_indices = @transform_0, window_bounds = array<i64: 200, 64>}, {pipeline_mode = #tpu.pipeline_mode<synchronous>, transform_indices = @transform_1, window_bounds = array<i64: 1, 64>}, {transform_indices = @transform_2, window_bounds = array<i64: 200, 1>}]} {
    %c0 = arith.constant 0 : index
    %c0_0 = arith.constant 0 : index
    %0 = vector.load %arg1[%c0, %c0_0] : memref<200x64xf32, #tpu.memory_space<vmem>>, vector<200x64xf32>
    %c0_1 = arith.constant 0 : index
    %c0_2 = arith.constant 0 : index
    %1 = vector.load %arg2[%c0_1, %c0_2] : memref<1x64xf32, #tpu.memory_space<vmem>>, vector<1x64xf32>
    %2 = vector.broadcast %1 : vector<1x64xf32> to vector<200x64xf32>
    %3 = arith.mulf %0, %2 : vector<200x64xf32>
    %cst = arith.constant dense<0.000000e+00> : vector<200xf32>
    %4 = vector.multi_reduction <add>, %3, %cst [1] : vector<200x64xf32> to vector<200xf32>
    %5 = vector.shape_cast %4 : vector<200xf32> to vector<200x1xf32>
    %c0_3 = arith.constant 0 : index
    %c0_4 = arith.constant 0 : index
    %6 = vector.load %arg3[%c0_3, %c0_4] : memref<200x1xf32, #tpu.memory_space<vmem>>, vector<200x1xf32>
    tpu.vector_store %arg3[%c0_3, %c0_4], %5 {strides = array<i32>} : memref<200x1xf32, #tpu.memory_space<vmem>>, vector<200x1xf32>,
    return
  }
  func.func @transform_0(%arg0: i32) -> (i32, i32) {
    %c0_i32 = arith.constant 0 : i32
    %c0_i32_0 = arith.constant 0 : i32
    return %arg0, %c0_i32 : i32, i32
  }
  func.func @transform_1(%arg0: i32) -> (i32, i32) {
    %c0_i32 = arith.constant 0 : i32
    %c0_i32_0 = arith.constant 0 : i32
    %c0_i32_1 = arith.constant 0 : i32
    return %c0_i32, %c0_i32_0 : i32, i32
  }
  func.func @transform_2(%arg0: i32) -> (i32, i32) {
    %c0_i32 = arith.constant 0 : i32
    %c0_i32_0 = arith.constant 0 : i32
    return %arg0, %c0_i32 : i32, i32
  }
}

</mosaic_0001>

<llo_original>
// kernel: tpu_custom_call.1
$region0: #{tpu_custom_call.1}
  #allocation0 [shape = 'u32[]', space=smem, size = 0x4, offset = 0x4, fixed_abs, tag = 'smem constant byte address 0x4 - core index']
  #allocation1 [shape = 'u32[144,128]{1,0:T(1,128)}', space=vmem, size = 0x12000, scoped, tag = 'internal scratch']
  %s0 = inlined_call_operand.vmem [shape: f32[200,64], index: 0, kind: input, shape index: {}]
  %s1 = inlined_call_operand.vmem [shape: f32[1,64], index: 1, kind: input, shape index: {}]
  %s2 = inlined_call_operand.vmem [shape: f32[200,1], index: 2, kind: output, shape index: {}]
  %s3 = sld [smem:[#allocation0]]
  $region18: #{tpu_custom_call.1} parent=0
    _
  %s5 = ssub.s32 1, %s3
  %s6 = scalar_select 0, %s5, %s3
  // Predicated region
  $region2: #{tpu_custom_call.1} parent=0 // pred_check
    _
  $region3: #{tpu_custom_call.1} parent=0 // pred_check_branch
    %8 = sbr.rel (0) target = $region5
  $region4: #{tpu_custom_call.1} parent=0 // pred_region
    _
  $region5: #{tpu_custom_call.1} parent=0 // pred_fallthru
    _
  // Predicated region
  $region6: #{tpu_custom_call.1} parent=0 // pred_check
    _
  $region7: #{tpu_custom_call.1} parent=0 // pred_check_branch
    %10 = sbr.rel (0) target = $region9
  $region8: #{tpu_custom_call.1} parent=0 // pred_region
    _
  $region9: #{tpu_custom_call.1} parent=0 // pred_fallthru
    _
  %v11 = vld [vmem:[%s0] sm:$0xff]
  %v12 = vld [vmem:[%s0 + $0x8] sm:$0xff]
  %v13 = vld [vmem:[%s0 + $0x10] sm:$0xff]
  %v14 = vld [vmem:[%s0 + $0x18] sm:$0xff]
  %v15 = vld [vmem:[%s0 + $0x20] sm:$0xff]
  %v16 = vld [vmem:[%s0 + $0x28] sm:$0xff]
  %v17 = vld [vmem:[%s0 + $0x30] sm:$0xff]
  %v18 = vld [vmem:[%s0 + $0x38] sm:$0xff]
  %v19 = vld [vmem:[%s0 + $0x40] sm:$0xff]
  %v20 = vld [vmem:[%s0 + $0x48] sm:$0xff]
  %v21 = vld [vmem:[%s0 + $0x50] sm:$0xff]
  %v22 = vld [vmem:[%s0 + $0x58] sm:$0xff]
  %v23 = vld [vmem:[%s0 + $0x60] sm:$0xff]
  %v24 = vld [vmem:[%s0 + $0x68] sm:$0xff]
  %v25 = vld [vmem:[%s0 + $0x70] sm:$0xff]
  %v26 = vld [vmem:[%s0 + $0x78] sm:$0xff]
  %v27 = vld [vmem:[%s0 + $0x80] sm:$0xff]
  %v28 = vld [vmem:[%s0 + $0x88] sm:$0xff]
  %v29 = vld [vmem:[%s0 + $0x90] sm:$0xff]
  %v30 = vld [vmem:[%s0 + $0x98] sm:$0xff]
  %v31 = vld [vmem:[%s0 + $0xa0] sm:$0xff]
  %v32 = vld [vmem:[%s0 + $0xa8] sm:$0xff]
  %v33 = vld [vmem:[%s0 + $0xb0] sm:$0xff]
  %v34 = vld [vmem:[%s0 + $0xb8] sm:$0xff]
  %v35 = vld [vmem:[%s0 + $0xc0] sm:$0xff]
  %v36 = vld [vmem:[%s1] sm:$0x1]
  %v38 = vlaneseq
  %v39 = vshrl.u32 %v38, 7
  %v40 = vsub.s32 0, %v39
  %v41 = vrot.slane %v36, %v40
  %v43 = vmul.f32 %v11, %v41
  %v44 = vmul.f32 %v12, %v41
  %v45 = vmul.f32 %v13, %v41
  %v46 = vmul.f32 %v14, %v41
  %v47 = vmul.f32 %v15, %v41
  %v48 = vmul.f32 %v16, %v41
  %v49 = vmul.f32 %v17, %v41
  %v50 = vmul.f32 %v18, %v41
  %v51 = vmul.f32 %v19, %v41
  %v52 = vmul.f32 %v20, %v41
  %v53 = vmul.f32 %v21, %v41
  %v54 = vmul.f32 %v22, %v41
  %v55 = vmul.f32 %v23, %v41
  %v56 = vmul.f32 %v24, %v41
  %v57 = vmul.f32 %v25, %v41
  %v58 = vmul.f32 %v26, %v41
  %v59 = vmul.f32 %v27, %v41
  %v60 = vmul.f32 %v28, %v41
  %v61 = vmul.f32 %v29, %v41
  %v62 = vmul.f32 %v30, %v41
  %v63 = vmul.f32 %v31, %v41
  %v64 = vmul.f32 %v32, %v41
  %v65 = vmul.f32 %v33, %v41
  %v66 = vmul.f32 %v34, %v41
  %v67 = vmul.f32 %v35, %v41
  %vm68 = vcmask 523264
  %v69 = vsel %vm68, %v43, 0.0
  %70 = vadd.xlane.f32.xlu0 %v69
  %v71 = vpop.xlane.xlu0 %70
  %v72 = vsel %vm68, %v44, 0.0
  %73 = vadd.xlane.f32.xlu0 %v72
  %v74 = vpop.xlane.xlu0 %73
  %v75 = vsel %vm68, %v45, 0.0
  %76 = vadd.xlane.f32.xlu0 %v75
  %v77 = vpop.xlane.xlu0 %76
  %v78 = vsel %vm68, %v46, 0.0
  %79 = vadd.xlane.f32.xlu0 %v78
  %v80 = vpop.xlane.xlu0 %79
  %v81 = vsel %vm68, %v47, 0.0
  %82 = vadd.xlane.f32.xlu0 %v81
  %v83 = vpop.xlane.xlu0 %82
  %v84 = vsel %vm68, %v48, 0.0
  %85 = vadd.xlane.f32.xlu0 %v84
  %v86 = vpop.xlane.xlu0 %85
  %v87 = vsel %vm68, %v49, 0.0
  %88 = vadd.xlane.f32.xlu0 %v87
  %v89 = vpop.xlane.xlu0 %88
  %v90 = vsel %vm68, %v50, 0.0
  %91 = vadd.xlane.f32.xlu0 %v90
  %v92 = vpop.xlane.xlu0 %91
  %v93 = vsel %vm68, %v51, 0.0
  %94 = vadd.xlane.f32.xlu0 %v93
  %v95 = vpop.xlane.xlu0 %94
  %v96 = vsel %vm68, %v52, 0.0
  %97 = vadd.xlane.f32.xlu0 %v96
  %v98 = vpop.xlane.xlu0 %97
  %v99 = vsel %vm68, %v53, 0.0
  %100 = vadd.xlane.f32.xlu0 %v99
  %v101 = vpop.xlane.xlu0 %100
  %v102 = vsel %vm68, %v54, 0.0
  %103 = vadd.xlane.f32.xlu0 %v102
  %v104 = vpop.xlane.xlu0 %103
  %v105 = vsel %vm68, %v55, 0.0
  %106 = vadd.xlane.f32.xlu0 %v105
  %v107 = vpop.xlane.xlu0 %106
  %v108 = vsel %vm68, %v56, 0.0
  %109 = vadd.xlane.f32.xlu0 %v108
  %v110 = vpop.xlane.xlu0 %109
  %v111 = vsel %vm68, %v57, 0.0
  %112 = vadd.xlane.f32.xlu0 %v111
  %v113 = vpop.xlane.xlu0 %112
  %v114 = vsel %vm68, %v58, 0.0
  %115 = vadd.xlane.f32.xlu0 %v114
  %v116 = vpop.xlane.xlu0 %115
  %v117 = vsel %vm68, %v59, 0.0
  %118 = vadd.xlane.f32.xlu0 %v117
  %v119 = vpop.xlane.xlu0 %118
  %v120 = vsel %vm68, %v60, 0.0
  %121 = vadd.xlane.f32.xlu0 %v120
  %v122 = vpop.xlane.xlu0 %121
  %v123 = vsel %vm68, %v61, 0.0
  %124 = vadd.xlane.f32.xlu0 %v123
  %v125 = vpop.xlane.xlu0 %124
  %v126 = vsel %vm68, %v62, 0.0
  %127 = vadd.xlane.f32.xlu0 %v126
  %v128 = vpop.xlane.xlu0 %127
  %v129 = vsel %vm68, %v63, 0.0
  %130 = vadd.xlane.f32.xlu0 %v129
  %v131 = vpop.xlane.xlu0 %130
  %v132 = vsel %vm68, %v64, 0.0
  %133 = vadd.xlane.f32.xlu0 %v132
  %v134 = vpop.xlane.xlu0 %133
  %v135 = vsel %vm68, %v65, 0.0
  %136 = vadd.xlane.f32.xlu0 %v135
  %v137 = vpop.xlane.xlu0 %136
  %v138 = vsel %vm68, %v66, 0.0
  %139 = vadd.xlane.f32.xlu0 %v138
  %v140 = vpop.xlane.xlu0 %139
  %v141 = vsel %vm68, %v67, 0.0
  %142 = vadd.xlane.f32.xlu0 %v141
  %v143 = vpop.xlane.xlu0 %142
  %vm144 = vcmask 7168
  %145 = vst.msk [vmem:[%s2] sm:$0xff] %vm144, %v71
  %146 = vst.msk [vmem:[%s2 + $0x8] sm:$0xff] %vm144, %v74
  %147 = vst.msk [vmem:[%s2 + $0x10] sm:$0xff] %vm144, %v77
  %148 = vst.msk [vmem:[%s2 + $0x18] sm:$0xff] %vm144, %v80
  %149 = vst.msk [vmem:[%s2 + $0x20] sm:$0xff] %vm144, %v83
  %150 = vst.msk [vmem:[%s2 + $0x28] sm:$0xff] %vm144, %v86
  %151 = vst.msk [vmem:[%s2 + $0x30] sm:$0xff] %vm144, %v89
  %152 = vst.msk [vmem:[%s2 + $0x38] sm:$0xff] %vm144, %v92
  %153 = vst.msk [vmem:[%s2 + $0x40] sm:$0xff] %vm144, %v95
  %154 = vst.msk [vmem:[%s2 + $0x48] sm:$0xff] %vm144, %v98
  %155 = vst.msk [vmem:[%s2 + $0x50] sm:$0xff] %vm144, %v101
  %156 = vst.msk [vmem:[%s2 + $0x58] sm:$0xff] %vm144, %v104
  %157 = vst.msk [vmem:[%s2 + $0x60] sm:$0xff] %vm144, %v107
  %158 = vst.msk [vmem:[%s2 + $0x68] sm:$0xff] %vm144, %v110
  %159 = vst.msk [vmem:[%s2 + $0x70] sm:$0xff] %vm144, %v113
  %160 = vst.msk [vmem:[%s2 + $0x78] sm:$0xff] %vm144, %v116
  %161 = vst.msk [vmem:[%s2 + $0x80] sm:$0xff] %vm144, %v119
  %162 = vst.msk [vmem:[%s2 + $0x88] sm:$0xff] %vm144, %v122
  %163 = vst.msk [vmem:[%s2 + $0x90] sm:$0xff] %vm144, %v125
  %164 = vst.msk [vmem:[%s2 + $0x98] sm:$0xff] %vm144, %v128
  %165 = vst.msk [vmem:[%s2 + $0xa0] sm:$0xff] %vm144, %v131
  %166 = vst.msk [vmem:[%s2 + $0xa8] sm:$0xff] %vm144, %v134
  %167 = vst.msk [vmem:[%s2 + $0xb0] sm:$0xff] %vm144, %v137
  %168 = vst.msk [vmem:[%s2 + $0xb8] sm:$0xff] %vm144, %v140
  %169 = vst.msk [vmem:[%s2 + $0xc0] sm:$0xff] %vm144, %v143
  // Predicated region
  $region10: #{tpu_custom_call.1} parent=0 // pred_check
    _
  $region11: #{tpu_custom_call.1} parent=0 // pred_check_branch
    %171 = sbr.rel (0) target = $region13
  $region12: #{tpu_custom_call.1} parent=0 // pred_region
    _
  $region13: #{tpu_custom_call.1} parent=0 // pred_fallthru
    _
  // Predicated region
  $region14: #{tpu_custom_call.1} parent=0 // pred_check
    _
  $region15: #{tpu_custom_call.1} parent=0 // pred_check_branch
    %173 = sbr.rel (0) target = $region17
  $region16: #{tpu_custom_call.1} parent=0 // pred_region
    _
  $region17: #{tpu_custom_call.1} parent=0 // pred_fallthru
    _

</llo_original>
